<compile_context>
chip_gen: v7x
topology: tpu7x:2x2x1
jax: 0.10.0
libtpu: 0.0.40
codegen_flags: <defaults>
</compile_context>

<pallas_src>
import functools

import jax
import jax.numpy as jnp
from jax.experimental import pallas as pl
from jax.experimental.pallas import tpu as pltpu


def _round_up(n, m):
    return ((n + m - 1) // m) * m


def _cdiv(a, b):
    return -(-a // b)


def _vmem_capacity_bytes():
    """Generation-aware VMEM capacity; conservative fallback if query fails."""
    try:
        info = pltpu.get_tpu_info()
        cap = getattr(info, "vmem_capacity_bytes", None)
        if cap:
            return int(cap)
    except Exception:
        pass
    return 64 << 20  # v7x per-TC VMEM (most restrictive)


# ----------------------------- kernels --------------------------------------


def _ffn_resident_kernel(x_ref, w1_ref, b1_ref, w2_ref, b2_ref, o_ref):
    # x_ref: (tm, Dp)  w1_ref: (Dp, Fp)  b1_ref: (1, Fp)
    # w2_ref: (Fp, Dp) b2_ref: (1, Dp)   o_ref: (tm, Dp)
    # Weights are VMEM-resident (constant index maps); whole FFN fused per M tile.
    h = jnp.dot(x_ref[...], w1_ref[...], preferred_element_type=jnp.float32)
    h = jnp.maximum(h + b1_ref[...].astype(jnp.float32), 0.0)
    # relu-dropout: eval mode == identity.
    acc = jnp.dot(h.astype(w2_ref.dtype), w2_ref[...],
                  preferred_element_type=jnp.float32)
    # output dropout: eval mode == identity.
    o_ref[...] = (acc + b2_ref[...].astype(jnp.float32)).astype(o_ref.dtype)


def _ffn_streamed_kernel(x_ref, w1_ref, b1_ref, w2_ref, b2_ref, o_ref, acc_ref):
    # x_ref: (tm, Dp)  w1_ref: (Dp, tf)  b1_ref: (1, tf)
    # w2_ref: (tf, Dp) b2_ref: (1, Dp)   o_ref: (tm, Dp)
    # acc_ref: (tm, Dp) f32 scratch, accumulates fc2 partials across the F axis.
    f = pl.program_id(1)

    @pl.when(f == 0)
    def _init():
        acc_ref[...] = jnp.zeros_like(acc_ref)

    h = jnp.dot(x_ref[...], w1_ref[...], preferred_element_type=jnp.float32)
    h = jnp.maximum(h + b1_ref[...].astype(jnp.float32), 0.0)
    # relu-dropout: eval mode == identity.
    acc_ref[...] += jnp.dot(h.astype(w2_ref.dtype), w2_ref[...],
                            preferred_element_type=jnp.float32)

    @pl.when(f == pl.num_programs(1) - 1)
    def _finalize():
        # b2 added exactly once; output dropout: eval mode == identity.
        o_ref[...] = (acc_ref[...] + b2_ref[...].astype(jnp.float32)).astype(o_ref.dtype)


# ----------------------------- wrapper ---------------------------------------


@functools.partial(jax.jit,
                   static_argnames=("tm", "tf", "cast_to_bf16", "force_streamed"))
def feed_forward(x, w1, b1, w2, b2, *, tm=None, tf=None,
                 cast_to_bf16=False, force_streamed=False):
    """x: (B, S, D). w1: (D, F), b1: (F,), w2: (F, D), b2: (D,). Returns (B, S, D)."""
    B, S, D = x.shape
    F = w1.shape[1]
    M = B * S
    out_dtype = x.dtype

    if cast_to_bf16:
        # Halves streamed weight bytes and runs the MXU at native bf16 rate;
        # f32 accumulation is preserved inside the kernel.
        x = x.astype(jnp.bfloat16)
        w1 = w1.astype(jnp.bfloat16)
        b1 = b1.astype(jnp.bfloat16)
        w2 = w2.astype(jnp.bfloat16)
        b2 = b2.astype(jnp.bfloat16)

    x_itemsize = jnp.dtype(x.dtype).itemsize
    w_itemsize = jnp.dtype(w1.dtype).itemsize
    out_itemsize = jnp.dtype(out_dtype).itemsize

    # Lane/sublane-dense padded dims.
    Dp = _round_up(D, 128)
    Fp128 = _round_up(F, 128)
    Mp = _round_up(M, 8)

    # Generation-aware VMEM budget (leave headroom for compiler scratch/spill).
    cap = _vmem_capacity_bytes()
    budget = (cap * 3) // 4

    # ---- M tile selection ----------------------------------------------------
    if tm is None:
        tm_sel = _round_up(min(512, Mp), 8)
        # Limit padding waste of the last (partial) M tile to ~20% when possible,
        # without dropping below 256 (keeps weight streaming compute-bound).
        while tm_sel > 256:
            g0 = _cdiv(Mp, tm_sel)
            if (g0 * tm_sel - Mp) * 5 <= g0 * tm_sel:
                break
            tm_sel = _round_up(tm_sel // 2, 8)
    else:
        tm_sel = min(_round_up(tm, 8), Mp)
    tm_sel = max(tm_sel, 8)

    # ---- weights-resident feasibility -----------------------------------------
    def _resident_est(tm_):
        return (4 * tm_ * Dp * x_itemsize                     # x + out (double-buffered)
                + 4 * Dp * Fp128 * w_itemsize                 # w1 + w2 buffers
                + 2 * (Fp128 + Dp) * w_itemsize               # biases
                + tm_ * Fp128 * 4                             # fc1 intermediate (f32)
                + tm_ * Dp * 4)                               # fc2 f32 result

    tm_res = tm_sel
    while _resident_est(tm_res) > budget and tm_res > 256:
        tm_res = _round_up(max(tm_res // 2, 8), 8)
    use_resident = (not force_streamed) and (_resident_est(tm_res) <= budget)

    if use_resident:
        tm_sel = tm_res
        tf_sel = Fp128
        Fp = Fp128
    else:
        # ---- streamed path: pick tf, shrink tf first (roofline-neutral), then tm.
        tf_pref = (1024 if w_itemsize <= 2 else 512) if tf is None else tf
        tf_sel = min(_round_up(tf_pref, 128), Fp128)

        def _streamed_est(tm_, tf_):
            return (4 * tm_ * Dp * x_itemsize                 # x + out (double-buffered)
                    + 4 * tf_ * Dp * w_itemsize               # w1 + w2 tile buffers
                    + 2 * (tf_ + Dp) * w_itemsize             # biases
                    + tm_ * Dp * 4                            # f32 accumulator scratch
                    + tm_ * tf_ * 4)                          # fc1 intermediate (f32)

        while _streamed_est(tm_sel, tf_sel) > budget:
            if tf_sel > 128:
                tf_sel = max(128, _round_up(tf_sel // 2, 128))
            elif tm_sel > 8:
                tm_sel = _round_up(max(tm_sel // 2, 8), 8)
            else:
                break
        # F blocks must tile Fp exactly (a partial F block would contaminate the
        # reduction); zero padding up to a multiple of tf is numerically exact.
        Fp = _round_up(F, tf_sel)

    grid0 = _cdiv(Mp, tm_sel)

    est = _resident_est(tm_sel) if use_resident else _streamed_est(tm_sel, tf_sel)
    vmem_limit = int(min(max(est * 5 // 4, 32 << 20), (cap * 4) // 5))

    # ---- padding (no-ops when dims are already aligned) -----------------------
    # TODO(synk): for production, pre-pad / pre-cast the weights once outside the
    # jitted call to avoid re-materializing them in HBM on every invocation.
    x2 = x.reshape(M, D)
    if Mp != M or Dp != D:
        x2 = jnp.pad(x2, ((0, Mp - M), (0, Dp - D)))
    w1p = jnp.pad(w1, ((0, Dp - D), (0, Fp - F))) if (Dp != D or Fp != F) else w1
    w2p = jnp.pad(w2, ((0, Fp - F), (0, Dp - D))) if (Dp != D or Fp != F) else w2
    b1p = (jnp.pad(b1, (0, Fp - F)) if Fp != F else b1).reshape(1, Fp)
    b2p = (jnp.pad(b2, (0, Dp - D)) if Dp != D else b2).reshape(1, Dp)

    # ---- cost estimate consistent with the actual DMA pattern -----------------
    m_work = grid0 * tm_sel
    streamed_w_bytes = (w1p.size + w2p.size + b1p.size) * w_itemsize
    weight_bytes = (streamed_w_bytes * (1 if use_resident else grid0)
                    + b2p.size * w_itemsize)                  # b2 fetched once
    cost = pl.CostEstimate(
        flops=4 * m_work * Dp * Fp,
        transcendentals=0,
        bytes_accessed=Mp * Dp * (x_itemsize + out_itemsize) + weight_bytes,
    )

    if use_resident:
        out2 = pl.pallas_call(
            _ffn_resident_kernel,
            out_shape=jax.ShapeDtypeStruct((Mp, Dp), out_dtype),
            grid_spec=pltpu.PrefetchScalarGridSpec(
                num_scalar_prefetch=0,
                grid=(grid0,),
                in_specs=[
                    pl.BlockSpec((tm_sel, Dp), lambda i: (i, 0)),   # x: streams over M
                    pl.BlockSpec((Dp, Fp), lambda i: (0, 0)),       # w1: resident
                    pl.BlockSpec((1, Fp), lambda i: (0, 0)),        # b1: resident
                    pl.BlockSpec((Fp, Dp), lambda i: (0, 0)),       # w2: resident
                    pl.BlockSpec((1, Dp), lambda i: (0, 0)),        # b2: resident
                ],
                out_specs=pl.BlockSpec((tm_sel, Dp), lambda i: (i, 0)),
            ),
            compiler_params=pltpu.CompilerParams(
                dimension_semantics=("parallel",),
                vmem_limit_bytes=vmem_limit),
            cost_estimate=cost,
        )(x2, w1p, b1p, w2p, b2p)
    else:
        out2 = pl.pallas_call(
            _ffn_streamed_kernel,
            out_shape=jax.ShapeDtypeStruct((Mp, Dp), out_dtype),
            grid_spec=pltpu.PrefetchScalarGridSpec(
                num_scalar_prefetch=0,
                grid=(grid0, Fp // tf_sel),
                in_specs=[
                    pl.BlockSpec((tm_sel, Dp), lambda i, f: (i, 0)),  # x: resident across F
                    pl.BlockSpec((Dp, tf_sel), lambda i, f: (0, f)),  # w1: streams along F
                    pl.BlockSpec((1, tf_sel), lambda i, f: (0, f)),   # b1: streams along F
                    pl.BlockSpec((tf_sel, Dp), lambda i, f: (f, 0)),  # w2: streams along F
                    pl.BlockSpec((1, Dp), lambda i, f: (0, 0)),       # b2: fetched once
                ],
                out_specs=pl.BlockSpec((tm_sel, Dp), lambda i, f: (i, 0)),  # accumulator
                scratch_shapes=[pltpu.VMEM((tm_sel, Dp), jnp.float32)],
            ),
            compiler_params=pltpu.CompilerParams(
                dimension_semantics=("parallel", "arbitrary"),
                vmem_limit_bytes=vmem_limit),
            cost_estimate=cost,
        )(x2, w1p, b1p, w2p, b2p)

    return out2[:M, :D].reshape(B, S, D)


def init_params(key, embed_dim, ffn_embed_dim, dtype=jnp.float32):
    """Deterministic init mimicking nn.Linear default (uniform +/- 1/sqrt(fan_in))."""
    k1, k2, k3, k4 = jax.random.split(key, 4)
    lim1 = 1.0 / (embed_dim ** 0.5)
    lim2 = 1.0 / (ffn_embed_dim ** 0.5)
    # Stored as (in_dim, out_dim) == torch weight transposed.
    w1 = jax.random.uniform(k1, (embed_dim, ffn_embed_dim), dtype, -lim1, lim1)
    b1 = jax.random.uniform(k2, (ffn_embed_dim,), dtype, -lim1, lim1)
    w2 = jax.random.uniform(k3, (ffn_embed_dim, embed_dim), dtype, -lim2, lim2)
    b2 = jax.random.uniform(k4, (embed_dim,), dtype, -lim2, lim2)
    return w1, b1, w2, b2


def _ref_ffn(x, w1, b1, w2, b2):
    return jnp.maximum(x @ w1 + b1, 0.0) @ w2 + b2


if __name__ == "__main__":
    key = jax.random.PRNGKey(0)
    kx, kp, kx2, kp2 = jax.random.split(key, 4)

    # --- test 1: small shapes, weights-resident path ---
    batch, seq, embed_dim, ffn_embed_dim = 2, 8, 32, 64
    x = jax.random.normal(kx, (batch, seq, embed_dim), dtype=jnp.float32)
    w1, b1, w2, b2 = init_params(kp, embed_dim, ffn_embed_dim)

    out = jax.block_until_ready(feed_forward(x, w1, b1, w2, b2))
    ref = _ref_ffn(x, w1, b1, w2, b2)
    assert out.shape == (batch, seq, embed_dim)
    assert jnp.allclose(out, ref, atol=2e-5, rtol=2e-5), float(jnp.max(jnp.abs(out - ref)))

    # --- test 2: partial last M tile (M not a multiple of tm), resident path ---
    b2_, s2_ = 2, 50   # M = 100, tm = 64 -> grid0 = 2, last tile partial
    x_b = jax.random.normal(kx2, (b2_, s2_, embed_dim), dtype=jnp.float32)
    out_b = jax.block_until_ready(feed_forward(x_b, w1, b1, w2, b2, tm=64))
    ref_b = _ref_ffn(x_b, w1, b1, w2, b2)
    assert jnp.allclose(out_b, ref_b, atol=2e-5, rtol=2e-5), \
        float(jnp.max(jnp.abs(out_b - ref_b)))

    # --- test 3: streamed (F-reduction) path with multiple F steps ---
    ffn_big = 256
    w1c, b1c, w2c, b2c = init_params(kp2, embed_dim, ffn_big)
    out_c = jax.block_until_ready(
        feed_forward(x, w1c, b1c, w2c, b2c, tf=128, force_streamed=True))
    ref_c = _ref_ffn(x, w1c, b1c, w2c, b2c)
    assert jnp.allclose(out_c, ref_c, atol=2e-5, rtol=2e-5), \
        float(jnp.max(jnp.abs(out_c - ref_c)))

    # --- test 4: optional bf16 fast path (loose tolerance) ---
    out_d = jax.block_until_ready(feed_forward(x, w1, b1, w2, b2, cast_to_bf16=True))
    assert jnp.allclose(out_d, ref, atol=1e-1, rtol=1e-1), \
        float(jnp.max(jnp.abs(out_d - ref)))

    print("KERNEL_OK")
</pallas_src>

<mosaic_0001>
module attributes {stable_mosaic.version = 11 : i64} {
  func.func @_ffn_resident_kernel(%arg0: i32, %arg1: memref<16x128xf32, #tpu.memory_space<vmem>>, %arg2: memref<128x128xf32, #tpu.memory_space<vmem>>, %arg3: memref<1x128xf32, #tpu.memory_space<vmem>>, %arg4: memref<128x128xf32, #tpu.memory_space<vmem>>, %arg5: memref<1x128xf32, #tpu.memory_space<vmem>>, %arg6: memref<16x128xf32, #tpu.memory_space<vmem>>) attributes {dimension_semantics = [#tpu.dimension_semantics<parallel>], iteration_bounds = array<i64: 1>, scalar_prefetch = 0 : i64, scratch_operands = 0 : i64, tpu.core_type = #tpu.core_type<tc>, window_params = [{transform_indices = @transform_0, window_bounds = array<i64: 16, 128>}, {pipeline_mode = #tpu.pipeline_mode<synchronous>, transform_indices = @transform_1, window_bounds = array<i64: 128, 128>}, {pipeline_mode = #tpu.pipeline_mode<synchronous>, transform_indices = @transform_2, window_bounds = array<i64: 1, 128>}, {pipeline_mode = #tpu.pipeline_mode<synchronous>, transform_indices = @transform_3, window_bounds = array<i64: 128, 128>}, {pipeline_mode = #tpu.pipeline_mode<synchronous>, transform_indices = @transform_4, window_bounds = array<i64: 1, 128>}, {transform_indices = @transform_5, window_bounds = array<i64: 16, 128>}]} {
    %c0 = arith.constant 0 : index
    %c0_0 = arith.constant 0 : index
    %0 = vector.load %arg1[%c0, %c0_0] : memref<16x128xf32, #tpu.memory_space<vmem>>, vector<16x128xf32>
    %c0_1 = arith.constant 0 : index
    %c0_2 = arith.constant 0 : index
    %1 = vector.load %arg2[%c0_1, %c0_2] : memref<128x128xf32, #tpu.memory_space<vmem>>, vector<128x128xf32>
    %cst = arith.constant dense<0.000000e+00> : vector<16x128xf32>
    %2 = tpu.matmul %0, %1, %cst {dimension_numbers = #tpu.dot_dimension_numbers<[1], [0], [0], [1], [0, 0, 1, 1], [], []>} : vector<16x128xf32>, vector<128x128xf32>, vector<16x128xf32> -> vector<16x128xf32>
    %c0_3 = arith.constant 0 : index
    %c0_4 = arith.constant 0 : index
    %3 = vector.load %arg3[%c0_3, %c0_4] : memref<1x128xf32, #tpu.memory_space<vmem>>, vector<1x128xf32>
    %4 = vector.broadcast %3 : vector<1x128xf32> to vector<16x128xf32>
    %5 = arith.addf %2, %4 : vector<16x128xf32>
    %cst_5 = arith.constant 0.000000e+00 : f32
    %6 = vector.broadcast %cst_5 : f32 to vector<16x128xf32>
    %7 = arith.maximumf %5, %6 : vector<16x128xf32>
    %c0_6 = arith.constant 0 : index
    %c0_7 = arith.constant 0 : index
    %8 = vector.load %arg4[%c0_6, %c0_7] : memref<128x128xf32, #tpu.memory_space<vmem>>, vector<128x128xf32>
    %cst_8 = arith.constant dense<0.000000e+00> : vector<16x128xf32>
    %9 = tpu.matmul %7, %8, %cst_8 {dimension_numbers = #tpu.dot_dimension_numbers<[1], [0], [0], [1], [0, 0, 1, 1], [], []>} : vector<16x128xf32>, vector<128x128xf32>, vector<16x128xf32> -> vector<16x128xf32>
    %c0_9 = arith.constant 0 : index
    %c0_10 = arith.constant 0 : index
    %10 = vector.load %arg5[%c0_9, %c0_10] : memref<1x128xf32, #tpu.memory_space<vmem>>, vector<1x128xf32>
    %11 = vector.broadcast %10 : vector<1x128xf32> to vector<16x128xf32>
    %12 = arith.addf %9, %11 : vector<16x128xf32>
    %c0_11 = arith.constant 0 : index
    %c0_12 = arith.constant 0 : index
    %13 = vector.load %arg6[%c0_11, %c0_12] : memref<16x128xf32, #tpu.memory_space<vmem>>, vector<16x128xf32>
    tpu.vector_store %arg6[%c0_11, %c0_12], %12 {strides = array<i32>} : memref<16x128xf32, #tpu.memory_space<vmem>>, vector<16x128xf32>,
    return
  }
  func.func @transform_0(%arg0: i32) -> (i32, i32) {
    %c0_i32 = arith.constant 0 : i32
    %c0_i32_0 = arith.constant 0 : i32
    return %arg0, %c0_i32 : i32, i32
  }
  func.func @transform_1(%arg0: i32) -> (i32, i32) {
    %c0_i32 = arith.constant 0 : i32
    %c0_i32_0 = arith.constant 0 : i32
    %c0_i32_1 = arith.constant 0 : i32
    return %c0_i32, %c0_i32_0 : i32, i32
  }
  func.func @transform_2(%arg0: i32) -> (i32, i32) {
    %c0_i32 = arith.constant 0 : i32
    %c0_i32_0 = arith.constant 0 : i32
    %c0_i32_1 = arith.constant 0 : i32
    return %c0_i32, %c0_i32_0 : i32, i32
  }
  func.func @transform_3(%arg0: i32) -> (i32, i32) {
    %c0_i32 = arith.constant 0 : i32
    %c0_i32_0 = arith.constant 0 : i32
    %c0_i32_1 = arith.constant 0 : i32
    return %c0_i32, %c0_i32_0 : i32, i32
  }
  func.func @transform_4(%arg0: i32) -> (i32, i32) {
    %c0_i32 = arith.constant 0 : i32
    %c0_i32_0 = arith.constant 0 : i32
    %c0_i32_1 = arith.constant 0 : i32
    return %c0_i32, %c0_i32_0 : i32, i32
  }
  func.func @transform_5(%arg0: i32) -> (i32, i32) {
    %c0_i32 = arith.constant 0 : i32
    %c0_i32_0 = arith.constant 0 : i32
    return %arg0, %c0_i32 : i32, i32
  }
}

</mosaic_0001>

<llo_original>
// kernel: feed_forward.1
$region0: #{feed_forward.1}
  #allocation0 [shape = 'u32[]', space=smem, size = 0x4, offset = 0x4, fixed_abs, tag = 'smem constant byte address 0x4 - core index']
  #allocation1 [shape = 'u32[144,128]{1,0:T(1,128)}', space=vmem, size = 0x12000, scoped, tag = 'internal scratch']
  %s0 = inlined_call_operand.vmem [shape: f32[16,128], index: 0, kind: input, shape index: {}]
  %s1 = inlined_call_operand.vmem [shape: f32[128,128], index: 1, kind: input, shape index: {}]
  %s2 = inlined_call_operand.vmem [shape: f32[1,128], index: 2, kind: input, shape index: {}]
  %s3 = inlined_call_operand.vmem [shape: f32[128,128], index: 3, kind: input, shape index: {}]
  %s4 = inlined_call_operand.vmem [shape: f32[1,128], index: 4, kind: input, shape index: {}]
  %s5 = inlined_call_operand.vmem [shape: f32[16,128], index: 5, kind: output, shape index: {}]
  %s6 = sld [smem:[#allocation0]]
  $region30: #{feed_forward.1} parent=0
    _
  %s8 = ssub.s32 1, %s6
  %s9 = scalar_select 0, %s8, %s6
  // Predicated region
  $region2: #{feed_forward.1} parent=0 // pred_check
    _
  $region3: #{feed_forward.1} parent=0 // pred_check_branch
    %11 = sbr.rel (0) target = $region5
  $region4: #{feed_forward.1} parent=0 // pred_region
    _
  $region5: #{feed_forward.1} parent=0 // pred_fallthru
    _
  // Predicated region
  $region6: #{feed_forward.1} parent=0 // pred_check
    _
  $region7: #{feed_forward.1} parent=0 // pred_check_branch
    %13 = sbr.rel (0) target = $region9
  $region8: #{feed_forward.1} parent=0 // pred_region
    _
  $region9: #{feed_forward.1} parent=0 // pred_fallthru
    _
  // Predicated region
  $region10: #{feed_forward.1} parent=0 // pred_check
    _
  $region11: #{feed_forward.1} parent=0 // pred_check_branch
    %15 = sbr.rel (0) target = $region13
  $region12: #{feed_forward.1} parent=0 // pred_region
    _
  $region13: #{feed_forward.1} parent=0 // pred_fallthru
    _
  // Predicated region
  $region14: #{feed_forward.1} parent=0 // pred_check
    _
  $region15: #{feed_forward.1} parent=0 // pred_check_branch
    %17 = sbr.rel (0) target = $region17
  $region16: #{feed_forward.1} parent=0 // pred_region
    _
  $region17: #{feed_forward.1} parent=0 // pred_fallthru
    _
  // Predicated region
  $region18: #{feed_forward.1} parent=0 // pred_check
    _
  $region19: #{feed_forward.1} parent=0 // pred_check_branch
    %19 = sbr.rel (0) target = $region21
  $region20: #{feed_forward.1} parent=0 // pred_region
    _
  $region21: #{feed_forward.1} parent=0 // pred_fallthru
    _
  %v20 = vld [vmem:[%s0] sm:$0xff]
  %v21 = vld [vmem:[%s0 + $0x8] sm:$0xff]
  %v22 = vld [vmem:[%s1] sm:$0xff]
  %v23 = vld [vmem:[%s1 + $0x8] sm:$0xff]
  %v24 = vld [vmem:[%s1 + $0x10] sm:$0xff]
  %v25 = vld [vmem:[%s1 + $0x18] sm:$0xff]
  %v26 = vld [vmem:[%s1 + $0x20] sm:$0xff]
  %v27 = vld [vmem:[%s1 + $0x28] sm:$0xff]
  %v28 = vld [vmem:[%s1 + $0x30] sm:$0xff]
  %v29 = vld [vmem:[%s1 + $0x38] sm:$0xff]
  %v30 = vld [vmem:[%s1 + $0x40] sm:$0xff]
  %v31 = vld [vmem:[%s1 + $0x48] sm:$0xff]
  %v32 = vld [vmem:[%s1 + $0x50] sm:$0xff]
  %v33 = vld [vmem:[%s1 + $0x58] sm:$0xff]
  %v34 = vld [vmem:[%s1 + $0x60] sm:$0xff]
  %v35 = vld [vmem:[%s1 + $0x68] sm:$0xff]
  %v36 = vld [vmem:[%s1 + $0x70] sm:$0xff]
  %v37 = vld [vmem:[%s1 + $0x78] sm:$0xff]
  %v38 = vld [vmem:[%s2] sm:$0x1]
  %v40 = vlaneseq
  %v41 = vshrl.u32 %v40, 7
  %v42 = vsub.s32 0, %v41
  %v43 = vrot.slane %v38, %v42
  %45 = vmatprep.subr.mxu0 0.0
  %46 = vmatpush1.msra.mxu0 %v22
  %47 = vmatprep.subr.mxu0 0.0
  %48 = vmatpush1.msra.mxu0 %v23
  %49 = vmatprep.subr.mxu0 0.0
  %50 = vmatpush1.msra.mxu0 %v24
  %51 = vmatprep.subr.mxu0 0.0
  %52 = vmatpush1.msra.mxu0 %v25
  %53 = vmatprep.subr.mxu0 0.0
  %54 = vmatpush1.msra.mxu0 %v26
  %55 = vmatprep.subr.mxu0 0.0
  %56 = vmatpush1.msra.mxu0 %v27
  %57 = vmatprep.subr.mxu0 0.0
  %58 = vmatpush1.msra.mxu0 %v28
  %59 = vmatprep.subr.mxu0 0.0
  %60 = vmatpush1.msra.mxu0 %v29
  %61 = vmatprep.subr.mxu0 0.0
  %62 = vmatpush1.msra.mxu0 %v30
  %63 = vmatprep.subr.mxu0 0.0
  %64 = vmatpush1.msra.mxu0 %v31
  %65 = vmatprep.subr.mxu0 0.0
  %66 = vmatpush1.msra.mxu0 %v32
  %67 = vmatprep.subr.mxu0 0.0
  %68 = vmatpush1.msra.mxu0 %v33
  %69 = vmatprep.subr.mxu0 0.0
  %70 = vmatpush1.msra.mxu0 %v34
  %71 = vmatprep.subr.mxu0 0.0
  %72 = vmatpush1.msra.mxu0 %v35
  %73 = vmatprep.subr.mxu0 0.0
  %74 = vmatpush1.msra.mxu0 %v36
  %75 = vmatprep.subr.mxu0 0.0
  %76 = vmatpush1.msra.mxu0 %v37
  %77 = vmatprep.subr.mxu0 0.0
  %78 = vmatpush1.msra.mxu0 0.0
  %79 = vmatprep.subr.mxu0 0.0
  %80 = vmatpush1.msra.mxu0 0.0
  %81 = vmatprep.subr.mxu0 0.0
  %82 = vmatpush1.msra.mxu0 0.0
  %83 = vmatprep.subr.mxu0 0.0
  %84 = vmatpush1.msra.mxu0 0.0
  %85 = vmatprep.subr.mxu0 0.0
  %86 = vmatpush1.msra.mxu0 0.0
  %87 = vmatprep.subr.mxu0 0.0
  %88 = vmatpush1.msra.mxu0 0.0
  %89 = vmatprep.subr.mxu0 0.0
  %90 = vmatpush1.msra.mxu0 0.0
  %91 = vmatprep.subr.mxu0 0.0
  %92 = vmatpush1.msra.mxu0 0.0
  %93 = vmatprep.subr.mxu0 0.0
  %94 = vmatpush1.msra.mxu0 0.0
  %95 = vmatprep.subr.mxu0 0.0
  %96 = vmatpush1.msra.mxu0 0.0
  %97 = vmatprep.subr.mxu0 0.0
  %98 = vmatpush1.msra.mxu0 0.0
  %99 = vmatprep.subr.mxu0 0.0
  %100 = vmatpush1.msra.mxu0 0.0
  %101 = vmatprep.subr.mxu0 0.0
  %102 = vmatpush1.msra.mxu0 0.0
  %103 = vmatprep.subr.mxu0 0.0
  %104 = vmatpush1.msra.mxu0 0.0
  %105 = vmatprep.subr.mxu0 0.0
  %106 = vmatpush1.msra.mxu0 0.0
  %107 = vmatprep.subr.mxu0 0.0
  %108 = vmatpush1.msra.mxu0 0.0
  %109 = vmatprep.mubr.f32.mxu0 0.0
  %110 = vmatmul.mubr.f32.gmra.mrb[0].mxu0 %v20
  %v111 = vpop.f32.mrb[0].mxu0
  %v112 = vadd.f32 %v43, %v111
  %v113 = vpop.f32.mrb[0].mxu0
  %114 = vmatprep.mubr.f32.mxu0 0.0
  %115 = vmatmul.mubr.f32.gmra.mrb[0].mxu0 %v21
  %v116 = vpop.f32.mrb[0].mxu0
  %v117 = vadd.f32 %v43, %v116
  %v118 = vpop.f32.mrb[0].mxu0
  %119 = vdwg.mxu0
  %v120 = vmax.f32 %v112, 0.0
  %v121 = vmax.f32 %v117, 0.0
  %v122 = vld [vmem:[%s3] sm:$0xff]
  %v123 = vld [vmem:[%s3 + $0x8] sm:$0xff]
  %v124 = vld [vmem:[%s3 + $0x10] sm:$0xff]
  %v125 = vld [vmem:[%s3 + $0x18] sm:$0xff]
  %v126 = vld [vmem:[%s3 + $0x20] sm:$0xff]
  %v127 = vld [vmem:[%s3 + $0x28] sm:$0xff]
  %v128 = vld [vmem:[%s3 + $0x30] sm:$0xff]
  %v129 = vld [vmem:[%s3 + $0x38] sm:$0xff]
  %v130 = vld [vmem:[%s3 + $0x40] sm:$0xff]
  %v131 = vld [vmem:[%s3 + $0x48] sm:$0xff]
  %v132 = vld [vmem:[%s3 + $0x50] sm:$0xff]
  %v133 = vld [vmem:[%s3 + $0x58] sm:$0xff]
  %v134 = vld [vmem:[%s3 + $0x60] sm:$0xff]
  %v135 = vld [vmem:[%s3 + $0x68] sm:$0xff]
  %v136 = vld [vmem:[%s3 + $0x70] sm:$0xff]
  %v137 = vld [vmem:[%s3 + $0x78] sm:$0xff]
  %v138 = vld [vmem:[%s4] sm:$0x1]
  %v140 = vlaneseq
  %v141 = vshrl.u32 %v140, 7
  %v142 = vsub.s32 0, %v141
  %v143 = vrot.slane %v138, %v142
  %145 = vmatprep.subr.mxu0 0.0
  %146 = vmatpush1.msra.mxu0 %v122
  %147 = vmatprep.subr.mxu0 0.0
  %148 = vmatpush1.msra.mxu0 %v123
  %149 = vmatprep.subr.mxu0 0.0
  %150 = vmatpush1.msra.mxu0 %v124
  %151 = vmatprep.subr.mxu0 0.0
  %152 = vmatpush1.msra.mxu0 %v125
  %153 = vmatprep.subr.mxu0 0.0
  %154 = vmatpush1.msra.mxu0 %v126
  %155 = vmatprep.subr.mxu0 0.0
  %156 = vmatpush1.msra.mxu0 %v127
  %157 = vmatprep.subr.mxu0 0.0
  %158 = vmatpush1.msra.mxu0 %v128
  %159 = vmatprep.subr.mxu0 0.0
  %160 = vmatpush1.msra.mxu0 %v129
  %161 = vmatprep.subr.mxu0 0.0
  %162 = vmatpush1.msra.mxu0 %v130
  %163 = vmatprep.subr.mxu0 0.0
  %164 = vmatpush1.msra.mxu0 %v131
  %165 = vmatprep.subr.mxu0 0.0
  %166 = vmatpush1.msra.mxu0 %v132
  %167 = vmatprep.subr.mxu0 0.0
  %168 = vmatpush1.msra.mxu0 %v133
  %169 = vmatprep.subr.mxu0 0.0
  %170 = vmatpush1.msra.mxu0 %v134
  %171 = vmatprep.subr.mxu0 0.0
  %172 = vmatpush1.msra.mxu0 %v135
  %173 = vmatprep.subr.mxu0 0.0
  %174 = vmatpush1.msra.mxu0 %v136
  %175 = vmatprep.subr.mxu0 0.0
  %176 = vmatpush1.msra.mxu0 %v137
  %177 = vmatprep.subr.mxu0 0.0
  %178 = vmatpush1.msra.mxu0 0.0
  %179 = vmatprep.subr.mxu0 0.0
  %180 = vmatpush1.msra.mxu0 0.0
  %181 = vmatprep.subr.mxu0 0.0
  %182 = vmatpush1.msra.mxu0 0.0
  %183 = vmatprep.subr.mxu0 0.0
  %184 = vmatpush1.msra.mxu0 0.0
  %185 = vmatprep.subr.mxu0 0.0
  %186 = vmatpush1.msra.mxu0 0.0
  %187 = vmatprep.subr.mxu0 0.0
  %188 = vmatpush1.msra.mxu0 0.0
  %189 = vmatprep.subr.mxu0 0.0
  %190 = vmatpush1.msra.mxu0 0.0
  %191 = vmatprep.subr.mxu0 0.0
  %192 = vmatpush1.msra.mxu0 0.0
  %193 = vmatprep.subr.mxu0 0.0
  %194 = vmatpush1.msra.mxu0 0.0
  %195 = vmatprep.subr.mxu0 0.0
  %196 = vmatpush1.msra.mxu0 0.0
  %197 = vmatprep.subr.mxu0 0.0
  %198 = vmatpush1.msra.mxu0 0.0
  %199 = vmatprep.subr.mxu0 0.0
  %200 = vmatpush1.msra.mxu0 0.0
  %201 = vmatprep.subr.mxu0 0.0
  %202 = vmatpush1.msra.mxu0 0.0
  %203 = vmatprep.subr.mxu0 0.0
  %204 = vmatpush1.msra.mxu0 0.0
  %205 = vmatprep.subr.mxu0 0.0
  %206 = vmatpush1.msra.mxu0 0.0
  %207 = vmatprep.subr.mxu0 0.0
  %208 = vmatpush1.msra.mxu0 0.0
  %209 = vmatprep.mubr.f32.mxu0 0.0
  %210 = vmatmul.mubr.f32.gmra.mrb[0].mxu0 %v120
  %v211 = vpop.f32.mrb[0].mxu0
  %v212 = vadd.f32 %v143, %v211
  %v213 = vpop.f32.mrb[0].mxu0
  %214 = vmatprep.mubr.f32.mxu0 0.0
  %215 = vmatmul.mubr.f32.gmra.mrb[0].mxu0 %v121
  %v216 = vpop.f32.mrb[0].mxu0
  %v217 = vadd.f32 %v143, %v216
  %v218 = vpop.f32.mrb[0].mxu0
  %219 = vdwg.mxu0
  %220 = vst [vmem:[%s5] sm:$0xff] %v212
  %221 = vst [vmem:[%s5 + $0x8] sm:$0xff] %v217
  // Predicated region
  $region22: #{feed_forward.1} parent=0 // pred_check
    _
  $region23: #{feed_forward.1} parent=0 // pred_check_branch
    %223 = sbr.rel (0) target = $region25
  $region24: #{feed_forward.1} parent=0 // pred_region
    _
  $region25: #{feed_forward.1} parent=0 // pred_fallthru
    _
  // Predicated region
  $region26: #{feed_forward.1} parent=0 // pred_check
    _
  $region27: #{feed_forward.1} parent=0 // pred_check_branch
    %225 = sbr.rel (0) target = $region29
  $region28: #{feed_forward.1} parent=0 // pred_region
    _
  $region29: #{feed_forward.1} parent=0 // pred_fallthru
    _

</llo_original>
